<compile_context>
chip_gen: v6e
topology: v6e:2x2x1
jax: 0.10.0
libtpu: 0.0.40
codegen_flags: <defaults>
</compile_context>

<pallas_src>
import math

import jax
import jax.numpy as jnp
from jax.experimental import pallas as pl
from jax.experimental.pallas import tpu as pltpu

NEG_SLOPE = 0.2             # PyG GATConv default negative_slope
MASK_VALUE = -1e30          # logit assigned to non-edges
LANE = 128
# Scoped VMEM: fits under v7x's 64 MiB physical VMEM with headroom; well under
# v5e/v6e's 128 MiB.
VMEM_LIMIT = 48 * 1024 * 1024
# Resident-h budget: <= 24 MiB even if the pipeline double-buffers the block.
H_RESIDENT_BYTES = 12 * 1024 * 1024


def _round_up(v, m):
    return ((v + m - 1) // m) * m


def _pick_tile(n_pad, candidates):
    """Largest candidate that divides n_pad (n_pad is a multiple of 128)."""
    for c in candidates:
        if n_pad % c == 0:
            return c
    return n_pad


# --------------------------- Pass 1: projection ------------------------------
def _project_kernel(x_ref, w_ref, att_src_ref, att_dst_ref,
                    h_ref, asrc_ref, adst_ref):
    # bf16 MXU projection for one tile of rows; f32 accumulate.
    h = jnp.dot(x_ref[...], w_ref[...], preferred_element_type=jnp.float32)
    # Per-node attention terms: VPU multiply + XLU row reduction
    # (avoids a lane-width-1 MXU matmul).
    asrc_ref[...] = jnp.sum(h * att_src_ref[...], axis=-1, keepdims=True)
    adst_ref[...] = jnp.sum(h * att_dst_ref[...], axis=-1, keepdims=True)
    # Stream h in bf16 (halves HBM/VMEM; it is consumed as bf16 downstream).
    h_ref[...] = h.astype(h_ref.dtype)


# ------------------- Pass 2: tiled online-softmax attention ------------------
def _gat_attention_kernel(nnz_ref, adst_ref, asrc_ref, h_ref, adj_ref, bias_ref,
                          out_ref, m_scr, l_scr, acc_scr):
    i = pl.program_id(0)                       # dst-tile index (parallel)
    j = pl.program_id(1)                       # src-tile index (innermost)

    @pl.when(j == 0)
    def _init():
        m_scr[...] = jnp.full(m_scr.shape, MASK_VALUE, jnp.float32)
        l_scr[...] = jnp.zeros(l_scr.shape, jnp.float32)
        acc_scr[...] = jnp.zeros(acc_scr.shape, jnp.float32)

    # Block-skip: do nothing for (dst,src) blocks with no edges.  Skipping is
    # exactly equivalent to processing them because p is masked to 0 below.
    @pl.when(nnz_ref[i * pl.num_programs(1) + j] > 0)
    def _compute():
        tk = adj_ref.shape[1]
        mask = adj_ref[...] != 0                            # int8 tile, no cast
        e = adst_ref[...] + asrc_ref[...]                   # [Tq,1]+[1,Tk]->[Tq,Tk]
        e = jnp.maximum(e, NEG_SLOPE * e)                   # LeakyReLU (1 op)
        e = jnp.where(mask, e, MASK_VALUE)

        # Online (flash-style) softmax over incoming edges (src axis).
        m_prev = m_scr[...]
        m_new = jnp.maximum(m_prev, jnp.max(e, axis=-1, keepdims=True))
        alpha = jnp.exp(m_prev - m_new)                     # rescale factor
        # Explicitly zero non-edges so rows with no edge in this block never
        # accumulate garbage (robust even without self-loops).
        p = jnp.where(mask, jnp.exp(e - m_new), 0.0)
        l_scr[...] = alpha * l_scr[...] + jnp.sum(p, axis=-1, keepdims=True)

        if h_ref.shape[0] > tk:
            # h is VMEM-resident for the whole grid: slice this src block.
            src0 = pl.multiple_of(j * tk, tk)
            h_blk = h_ref[pl.ds(src0, tk), :]
        else:
            h_blk = h_ref[...]                              # streamed per block
        # bf16 MXU inputs, f32 accumulation.
        # TODO(synk): on v6e/v7x compute the exp itself in bf16 (bf16 EUP path);
        # kept f32 here so the same kernel is also optimal/safe on v5e.
        acc_scr[...] = alpha * acc_scr[...] + jnp.dot(
            p.astype(jnp.bfloat16), h_blk, preferred_element_type=jnp.float32)
        m_scr[...] = m_new

    @pl.when(j == pl.num_programs(1) - 1)
    def _finalize():
        # Tiny floor keeps in-degree-0 (padded) rows finite; real nodes always
        # have at least a self-loop so l >= exp(0) there.
        l_safe = jnp.maximum(l_scr[...], 1e-20)
        inv_l = pl.reciprocal(l_safe, approx=True)          # EUP vrcp
        out = acc_scr[...] * inv_l + bias_ref[...]
        out_ref[...] = jnp.maximum(out, 0.0).astype(out_ref.dtype)  # ReLU


# ------------------------------ JAX wrapper ----------------------------------
def gat_conv_relu(x, edge_index, w_t, att_src, att_dst, bias):
    """One GATConv(heads=1) + ReLU for a single node type."""
    n, fin = x.shape
    fout = w_t.shape[1]

    n_pad = _round_up(n, LANE)
    fin_p = _round_up(fin, LANE)
    f_p = _round_up(fout, LANE)                         # lane-dense features
    tq = _pick_tile(n_pad, (2048, 1024, 512, 256, 128))  # dst rows per step
    tk = _pick_tile(n_pad, (1024, 512, 256, 128))        # src cols per step
    # Keep each [tq, tk] f32 temporary <= ~4 MiB so the pass-2 working set
    # (temps + adj tiles + acc + resident h) stays inside v7x's 64 MiB VMEM.
    while tq > 128 and tq * tk > (1 << 20):
        tq //= 2

    # Zero padding does not change the result: padded feature columns are zero,
    # padded nodes are masked out by adj, padded dst rows are sliced off.
    x_p = jnp.zeros((n_pad, fin_p), jnp.bfloat16).at[:n, :fin].set(
        x.astype(jnp.bfloat16))
    w_p = jnp.zeros((fin_p, f_p), jnp.bfloat16).at[:fin, :fout].set(
        w_t.astype(jnp.bfloat16))
    as_p = jnp.zeros((1, f_p), jnp.float32).at[:, :fout].set(att_src)
    ad_p = jnp.zeros((1, f_p), jnp.float32).at[:, :fout].set(att_dst)
    b_p = jnp.zeros((1, f_p), jnp.float32).at[:, :fout].set(bias)
    adj = edges_to_dense_adj(edge_index, n, n_pad)      # int8 [n_pad, n_pad]

    # ---- pass 1: projection + per-node attention terms ----
    # TODO(synk): for very large fin_p*f_p, add a second grid axis over f_p so
    # the resident weight block stays well under v7x's 64 MiB VMEM.
    h, a_src_col, a_dst_col = pl.pallas_call(
        _project_kernel,
        out_shape=(jax.ShapeDtypeStruct((n_pad, f_p), jnp.bfloat16),
                   jax.ShapeDtypeStruct((n_pad, 1), jnp.float32),
                   jax.ShapeDtypeStruct((n_pad, 1), jnp.float32)),
        grid=(n_pad // tq,),
        in_specs=[pl.BlockSpec((tq, fin_p), lambda i: (i, 0)),
                  pl.BlockSpec((fin_p, f_p), lambda i: (0, 0)),
                  pl.BlockSpec((1, f_p), lambda i: (0, 0)),
                  pl.BlockSpec((1, f_p), lambda i: (0, 0))],
        out_specs=(pl.BlockSpec((tq, f_p), lambda i: (i, 0)),
                   pl.BlockSpec((tq, 1), lambda i: (i, 0)),
                   pl.BlockSpec((tq, 1), lambda i: (i, 0))),
        compiler_params=pltpu.CompilerParams(
            dimension_semantics=("parallel",),
            vmem_limit_bytes=VMEM_LIMIT),
    )(x_p, w_p, as_p, ad_p)

    # Layout plumbing only (tiny data volume): present a_src as a lane-dense
    # row [1, n_pad] so the attention kernel broadcasts it along lanes.
    a_src_row = a_src_col.reshape(1, n_pad)

    # Per-block occupancy table (scalar-prefetched into SMEM) for block-skip.
    nblk_q, nblk_k = n_pad // tq, n_pad // tk
    blk_nnz = jnp.sum(adj.reshape(nblk_q, tq, nblk_k, tk),
                      axis=(1, 3), dtype=jnp.int32).reshape(-1)

    # Keep h resident in VMEM across the whole grid when it fits the budget;
    # otherwise stream it per src block.
    if n_pad * f_p * 2 <= H_RESIDENT_BYTES:
        h_spec = pl.BlockSpec((n_pad, f_p), lambda i, j, nnz: (0, 0))
    else:
        h_spec = pl.BlockSpec((tk, f_p), lambda i, j, nnz: (j, 0))

    # ---- pass 2: tiled flash-style attention + aggregation + bias + ReLU ----
    # TODO(synk): for large sparse graphs, compact the src axis per dst tile
    # (data-dependent index_map over occupied blocks) and/or bit-pack adj so
    # empty blocks are never DMA'd either (v5e bandwidth).
    out = pl.pallas_call(
        _gat_attention_kernel,
        out_shape=jax.ShapeDtypeStruct((n_pad, f_p), jnp.float32),
        grid_spec=pltpu.PrefetchScalarGridSpec(
            num_scalar_prefetch=1,
            grid=(nblk_q, nblk_k),
            in_specs=[pl.BlockSpec((tq, 1), lambda i, j, nnz: (i, 0)),    # a_dst
                      pl.BlockSpec((1, tk), lambda i, j, nnz: (0, j)),    # a_src
                      h_spec,                                             # h bf16
                      pl.BlockSpec((tq, tk), lambda i, j, nnz: (i, j)),   # adj i8
                      pl.BlockSpec((1, f_p), lambda i, j, nnz: (0, 0))],  # bias
            out_specs=pl.BlockSpec((tq, f_p), lambda i, j, nnz: (i, 0)),
            scratch_shapes=[pltpu.VMEM((tq, 1), jnp.float32),             # m
                            pltpu.VMEM((tq, 1), jnp.float32),             # l
                            pltpu.VMEM((tq, f_p), jnp.float32)]),         # acc
        compiler_params=pltpu.CompilerParams(
            dimension_semantics=("parallel", "arbitrary"),
            vmem_limit_bytes=VMEM_LIMIT),
    )(blk_nnz, a_dst_col, a_src_row, h, adj, b_p)

    return out[:n, :fout]


def edges_to_dense_adj(edge_index, num_nodes, num_nodes_padded):
    """Dense {0,1} int8 mask adj[dst, src]; forces self-loops for real nodes."""
    # TODO(synk): for large sparse graphs, replace the dense O(N^2) mask with a
    # CSR neighbor list + scalar-prefetch DMA gather of h_src rows (O(E) work).
    src, dst = edge_index[0], edge_index[1]
    adj = jnp.zeros((num_nodes_padded, num_nodes_padded), jnp.int8)
    adj = adj.at[dst, src].set(jnp.int8(1))
    idx = jnp.arange(num_nodes, dtype=jnp.int32)
    adj = adj.at[idx, idx].set(jnp.int8(1))   # remove_self_loops + add_self_loops
    return adj


def _glorot(key, shape):
    fan_in, fan_out = shape[-1], shape[-2] if len(shape) > 1 else shape[-1]
    limit = math.sqrt(6.0 / (fan_in + fan_out))
    return jax.random.uniform(key, shape, jnp.float32, -limit, limit)


def init_hetero_gat_params(key, in_channels_dict, out_channels):
    params = {}
    for i, (obj_type, fin) in enumerate(sorted(in_channels_dict.items())):
        k_w, k_as, k_ad, k_b = jax.random.split(jax.random.fold_in(key, i), 4)
        w = _glorot(k_w, (out_channels, fin))          # PyG lin weight [out, in]
        params[obj_type] = dict(
            w_t=w.T,                                   # [in, out]
            att_src=_glorot(k_as, (1, out_channels)),
            att_dst=_glorot(k_ad, (1, out_channels)),
            bias=0.01 * jax.random.normal(k_b, (1, out_channels), jnp.float32),
        )
    return params


def hetero_gat_forward(params, data):
    """data: {node_type: {'x': [N, Fin], 'edge_index': [2, E] int32}}."""
    # TODO(synk): fuse all node types into one pallas_call (grid over types with
    # per-type row offsets via PrefetchScalarGridSpec) so tiny per-type graphs
    # amortize launch/pipeline overhead and v7x's second TensorCore gets work.
    out = {}
    for obj_type, store in data.items():
        p = params[obj_type]
        y = gat_conv_relu(store["x"], store["edge_index"],
                          p["w_t"], p["att_src"], p["att_dst"], p["bias"])
        out[obj_type] = dict(store, x=y)
    return out


# Pure-f32 JAX reference (exact module semantics) for a correctness check.
def _reference(params, data):
    out = {}
    for obj_type, store in data.items():
        x = store["x"]
        p = params[obj_type]
        n = x.shape[0]
        src, dst = store["edge_index"]
        adj = jnp.zeros((n, n), jnp.float32).at[dst, src].set(1.0)
        adj = adj.at[jnp.arange(n), jnp.arange(n)].set(1.0)
        h = x @ p["w_t"]
        a_dst = jnp.sum(h * p["att_dst"], -1, keepdims=True)
        a_src = jnp.sum(h * p["att_src"], -1, keepdims=True)
        e = a_dst + a_src.T
        e = jnp.where(e > 0, e, NEG_SLOPE * e)
        e = jnp.where(adj > 0, e, MASK_VALUE)
        attn = jax.nn.softmax(e, axis=-1)
        out[obj_type] = jnp.maximum(attn @ h + p["bias"], 0.0)
    return out


if __name__ == "__main__":
    key = jax.random.PRNGKey(0)

    # Small heterogeneous graph: two node types with different feature widths.
    in_channels_dict = {"agent": 16, "item": 8}
    out_channels = 32
    num_nodes = {"agent": 16, "item": 8}

    data = {}
    for ti, (t, fin) in enumerate(sorted(in_channels_dict.items())):
        n = num_nodes[t]
        kx = jax.random.fold_in(key, 100 + ti)
        x = jax.random.normal(kx, (n, fin), jnp.float32)
        # Deterministic duplicate-free edge set: two rings i -> i+1, i -> i+3.
        idx = jnp.arange(n, dtype=jnp.int32)
        src = jnp.concatenate([idx, idx])
        dst = jnp.concatenate([(idx + 1) % n, (idx + 3) % n])
        data[t] = {"x": x, "edge_index": jnp.stack([src, dst])}

    params = init_hetero_gat_params(key, in_channels_dict, out_channels)

    out = hetero_gat_forward(params, data)
    jax.block_until_ready(out)

    ref = _reference(params, data)
    for t in data:
        y = out[t]["x"]
        assert y.shape == (num_nodes[t], out_channels), t
        assert bool(jnp.all(jnp.isfinite(y))), t
        # Kernel uses bf16 x/W/h/p and an approx reciprocal; errors vs. the
        # pure-f32 reference are O(1e-2) while a real bug (mask / softmax /
        # rescale) would be O(1).
        assert jnp.allclose(y, ref[t], rtol=5e-2, atol=5e-2), t

    print("KERNEL_OK")
</pallas_src>

<mosaic_0001>
module attributes {stable_mosaic.version = 11 : i64} {
  func.func @_project_kernel(%arg0: i32, %arg1: memref<128x128xbf16, #tpu.memory_space<vmem>>, %arg2: memref<128x128xbf16, #tpu.memory_space<vmem>>, %arg3: memref<1x128xf32, #tpu.memory_space<vmem>>, %arg4: memref<1x128xf32, #tpu.memory_space<vmem>>, %arg5: memref<128x128xbf16, #tpu.memory_space<vmem>>, %arg6: memref<128x1xf32, #tpu.memory_space<vmem>>, %arg7: memref<128x1xf32, #tpu.memory_space<vmem>>) attributes {dimension_semantics = [#tpu.dimension_semantics<parallel>], iteration_bounds = array<i64: 1>, scalar_prefetch = 0 : i64, scratch_operands = 0 : i64, tpu.core_type = #tpu.core_type<tc>, window_params = [{transform_indices = @transform_0, window_bounds = array<i64: 128, 128>}, {pipeline_mode = #tpu.pipeline_mode<synchronous>, transform_indices = @transform_1, window_bounds = array<i64: 128, 128>}, {pipeline_mode = #tpu.pipeline_mode<synchronous>, transform_indices = @transform_2, window_bounds = array<i64: 1, 128>}, {pipeline_mode = #tpu.pipeline_mode<synchronous>, transform_indices = @transform_3, window_bounds = array<i64: 1, 128>}, {transform_indices = @transform_4, window_bounds = array<i64: 128, 128>}, {transform_indices = @transform_5, window_bounds = array<i64: 128, 1>}, {transform_indices = @transform_6, window_bounds = array<i64: 128, 1>}]} {
    %c0 = arith.constant 0 : index
    %c0_0 = arith.constant 0 : index
    %0 = vector.load %arg1[%c0, %c0_0] : memref<128x128xbf16, #tpu.memory_space<vmem>>, vector<128x128xbf16>
    %c0_1 = arith.constant 0 : index
    %c0_2 = arith.constant 0 : index
    %1 = vector.load %arg2[%c0_1, %c0_2] : memref<128x128xbf16, #tpu.memory_space<vmem>>, vector<128x128xbf16>
    %cst = arith.constant dense<0.000000e+00> : vector<128x128xf32>
    %2 = tpu.matmul %0, %1, %cst {dimension_numbers = #tpu.dot_dimension_numbers<[1], [0], [0], [1], [0, 0, 1, 1], [], []>} : vector<128x128xbf16>, vector<128x128xbf16>, vector<128x128xf32> -> vector<128x128xf32>
    %c0_3 = arith.constant 0 : index
    %c0_4 = arith.constant 0 : index
    %3 = vector.load %arg3[%c0_3, %c0_4] : memref<1x128xf32, #tpu.memory_space<vmem>>, vector<1x128xf32>
    %4 = vector.broadcast %3 : vector<1x128xf32> to vector<128x128xf32>
    %5 = arith.mulf %2, %4 : vector<128x128xf32>
    %cst_5 = arith.constant dense<0.000000e+00> : vector<128xf32>
    %6 = vector.multi_reduction <add>, %5, %cst_5 [1] : vector<128x128xf32> to vector<128xf32>
    %7 = vector.shape_cast %6 : vector<128xf32> to vector<128x1xf32>
    %c0_6 = arith.constant 0 : index
    %c0_7 = arith.constant 0 : index
    %8 = vector.load %arg6[%c0_6, %c0_7] : memref<128x1xf32, #tpu.memory_space<vmem>>, vector<128x1xf32>
    tpu.vector_store %arg6[%c0_6, %c0_7], %7 {strides = array<i32>} : memref<128x1xf32, #tpu.memory_space<vmem>>, vector<128x1xf32>,
    %c0_8 = arith.constant 0 : index
    %c0_9 = arith.constant 0 : index
    %9 = vector.load %arg4[%c0_8, %c0_9] : memref<1x128xf32, #tpu.memory_space<vmem>>, vector<1x128xf32>
    %10 = vector.broadcast %9 : vector<1x128xf32> to vector<128x128xf32>
    %11 = arith.mulf %2, %10 : vector<128x128xf32>
    %cst_10 = arith.constant dense<0.000000e+00> : vector<128xf32>
    %12 = vector.multi_reduction <add>, %11, %cst_10 [1] : vector<128x128xf32> to vector<128xf32>
    %13 = vector.shape_cast %12 : vector<128xf32> to vector<128x1xf32>
    %c0_11 = arith.constant 0 : index
    %c0_12 = arith.constant 0 : index
    %14 = vector.load %arg7[%c0_11, %c0_12] : memref<128x1xf32, #tpu.memory_space<vmem>>, vector<128x1xf32>
    tpu.vector_store %arg7[%c0_11, %c0_12], %13 {strides = array<i32>} : memref<128x1xf32, #tpu.memory_space<vmem>>, vector<128x1xf32>,
    %15 = arith.truncf %2 : vector<128x128xf32> to vector<128x128xbf16>
    %c0_13 = arith.constant 0 : index
    %c0_14 = arith.constant 0 : index
    %16 = vector.load %arg5[%c0_13, %c0_14] : memref<128x128xbf16, #tpu.memory_space<vmem>>, vector<128x128xbf16>
    tpu.vector_store %arg5[%c0_13, %c0_14], %15 {strides = array<i32>} : memref<128x128xbf16, #tpu.memory_space<vmem>>, vector<128x128xbf16>,
    return
  }
  func.func @transform_0(%arg0: i32) -> (i32, i32) {
    %c0_i32 = arith.constant 0 : i32
    %c0_i32_0 = arith.constant 0 : i32
    return %arg0, %c0_i32 : i32, i32
  }
  func.func @transform_1(%arg0: i32) -> (i32, i32) {
    %c0_i32 = arith.constant 0 : i32
    %c0_i32_0 = arith.constant 0 : i32
    %c0_i32_1 = arith.constant 0 : i32
    return %c0_i32, %c0_i32_0 : i32, i32
  }
  func.func @transform_2(%arg0: i32) -> (i32, i32) {
    %c0_i32 = arith.constant 0 : i32
    %c0_i32_0 = arith.constant 0 : i32
    %c0_i32_1 = arith.constant 0 : i32
    return %c0_i32, %c0_i32_0 : i32, i32
  }
  func.func @transform_3(%arg0: i32) -> (i32, i32) {
    %c0_i32 = arith.constant 0 : i32
    %c0_i32_0 = arith.constant 0 : i32
    %c0_i32_1 = arith.constant 0 : i32
    return %c0_i32, %c0_i32_0 : i32, i32
  }
  func.func @transform_4(%arg0: i32) -> (i32, i32) {
    %c0_i32 = arith.constant 0 : i32
    %c0_i32_0 = arith.constant 0 : i32
    return %arg0, %c0_i32 : i32, i32
  }
  func.func @transform_5(%arg0: i32) -> (i32, i32) {
    %c0_i32 = arith.constant 0 : i32
    %c0_i32_0 = arith.constant 0 : i32
    return %arg0, %c0_i32 : i32, i32
  }
  func.func @transform_6(%arg0: i32) -> (i32, i32) {
    %c0_i32 = arith.constant 0 : i32
    %c0_i32_0 = arith.constant 0 : i32
    return %arg0, %c0_i32 : i32, i32
  }
}

</mosaic_0001>

<llo_original>
// kernel: tpu_custom_call.1
$region0: #{tpu_custom_call.1}
  #allocation0 [shape = 'u32[]', space=smem, size = 0x4, offset = 0x4, fixed_abs, tag = 'smem constant byte address 0x4 - core index']
  #allocation1 [shape = 'u32[144,128]{1,0:T(1,128)}', space=vmem, size = 0x12000, scoped, tag = 'internal scratch']
  %s0 = inlined_call_operand.hbm [shape: bf16[128,128], index: 0, kind: input, shape index: {}]
  %s1 = inlined_call_operand.hbm [shape: bf16[128,128], index: 1, kind: input, shape index: {}]
  %s2 = inlined_call_operand.vmem [shape: f32[1,128], index: 2, kind: input, shape index: {}]
  %s3 = inlined_call_operand.vmem [shape: f32[1,128], index: 3, kind: input, shape index: {}]
  %s4 = inlined_call_operand.hbm [shape: bf16[128,128], index: 4, kind: output, shape index: {0}]
  %s5 = inlined_call_operand.vmem [shape: f32[128,1], index: 5, kind: output, shape index: {1}]
  %s6 = inlined_call_operand.vmem [shape: f32[128,1], index: 6, kind: output, shape index: {2}]
  %7 = xla_tuple %s4, %s5, %s6
  %s8 = sld [smem:[#allocation0]]
  $region50: #{tpu_custom_call.1} parent=0
    _
  %s10 = ssub.s32 1, %s8
  %s11 = scalar_select 0, %s10, %s8
  $region1: #{tpu_custom_call.1} parent=0
    #allocation2 [shape = 'u8[32768]{0}', space=vmem, size = 0x8000, scoped, tag = 'input window, operand 0, single buffered']
    #allocation3 [shape = 's32[1]{0}', space=sflag, size = 0x4, scoped, tag = 'scoped memory for tpu_custom_call.1']
    #allocation4 [shape = 's32[1]{0}', space=sflag, size = 0x4, scoped, tag = 'scoped memory for tpu_custom_call.1']
    #allocation5 [shape = 'u8[32768]{0}', space=vmem, size = 0x8000, scoped, tag = 'input window, operand 1, single buffered']
    #allocation6 [shape = 's32[1]{0}', space=sflag, size = 0x4, scoped, tag = 'scoped memory for tpu_custom_call.1']
    #allocation7 [shape = 'u8[32768]{0}', space=vmem, size = 0x8000, scoped, tag = 'output window, operand 0, single buffered']
    %12 = vsyncpa [#allocation3], 0
    %13 = vsyncpa [#allocation6], 0
    %14 = vsyncpa [#allocation4], 0
    // Predicated region
    $region2: #{tpu_custom_call.1} parent=1 // pred_check
      _
    $region3: #{tpu_custom_call.1} parent=1 // pred_check_branch
      %16 = sbr.rel (0) target = $region5
    $region4: #{tpu_custom_call.1} parent=1 // pred_region
      %s18 = ssub.s32 1024, 1024
      %19 = vsyncadd [#allocation3], %s18
      %s20 = sshll.u32 [#allocation2], 4
      %s21 = int_to_ptr.vmem [resolvable:$true] %s20
      %26 = dma.hbm_to_vmem [thread:$0]  %s0, 1024, %s21, [#allocation3], 64, 64, 4
    $region5: #{tpu_custom_call.1} parent=1 // pred_fallthru
      _
    // Predicated region
    $region6: #{tpu_custom_call.1} parent=1 // pred_check
      _
    $region7: #{tpu_custom_call.1} parent=1 // pred_check_branch
      %28 = sbr.rel (0) target = $region9
    $region8: #{tpu_custom_call.1} parent=1 // pred_region
      %s30 = ssub.s32 1024, 1024
      %31 = vsyncadd [#allocation6], %s30
      %s32 = sshll.u32 [#allocation5], 4
      %s33 = int_to_ptr.vmem [resolvable:$true] %s32
      %38 = dma.hbm_to_vmem [thread:$0]  %s1, 1024, %s33, [#allocation6], 64, 64, 4
    $region9: #{tpu_custom_call.1} parent=1 // pred_fallthru
      _
    // Predicated region
    $region10: #{tpu_custom_call.1} parent=1 // pred_check
      _
    $region11: #{tpu_custom_call.1} parent=1 // pred_check_branch
      %40 = sbr.rel (0) target = $region13
    $region12: #{tpu_custom_call.1} parent=1 // pred_region
      _
    $region13: #{tpu_custom_call.1} parent=1 // pred_fallthru
      _
    // Predicated region
    $region14: #{tpu_custom_call.1} parent=1 // pred_check
      _
    $region15: #{tpu_custom_call.1} parent=1 // pred_check_branch
      %42 = sbr.rel (0) target = $region17
    $region16: #{tpu_custom_call.1} parent=1 // pred_region
      _
    $region17: #{tpu_custom_call.1} parent=1 // pred_fallthru
      _
    // Predicated region
    $region18: #{tpu_custom_call.1} parent=1 // pred_check
      _
    $region19: #{tpu_custom_call.1} parent=1 // pred_check_branch
      %44 = sbr.rel (0) target = $region21
    $region20: #{tpu_custom_call.1} parent=1 // pred_region
      %45 = dma.done [#allocation3], 1024
    $region21: #{tpu_custom_call.1} parent=1 // pred_fallthru
      _
    // Predicated region
    $region22: #{tpu_custom_call.1} parent=1 // pred_check
      _
    $region23: #{tpu_custom_call.1} parent=1 // pred_check_branch
      %47 = sbr.rel (0) target = $region25
    $region24: #{tpu_custom_call.1} parent=1 // pred_region
      %48 = dma.done [#allocation6], 1024
    $region25: #{tpu_custom_call.1} parent=1 // pred_fallthru
      _
    %v50 = vld [vmem:[#allocation2] sm:$0xf]
    %v51 = vld [vmem:[#allocation2 + $0x4] sm:$0xf]
    %v52 = vld [vmem:[#allocation2 + $0x8] sm:$0xf]
    %v53 = vld [vmem:[#allocation2 + $0xc] sm:$0xf]
    %v54 = vld [vmem:[#allocation2 + $0x10] sm:$0xf]
    %v55 = vld [vmem:[#allocation2 + $0x14] sm:$0xf]
    %v56 = vld [vmem:[#allocation2 + $0x18] sm:$0xf]
    %v57 = vld [vmem:[#allocation2 + $0x1c] sm:$0xf]
    %v58 = vld [vmem:[#allocation2 + $0x20] sm:$0xf]
    %v59 = vld [vmem:[#allocation2 + $0x24] sm:$0xf]
    %v60 = vld [vmem:[#allocation2 + $0x28] sm:$0xf]
    %v61 = vld [vmem:[#allocation2 + $0x2c] sm:$0xf]
    %v62 = vld [vmem:[#allocation2 + $0x30] sm:$0xf]
    %v63 = vld [vmem:[#allocation2 + $0x34] sm:$0xf]
    %v64 = vld [vmem:[#allocation2 + $0x38] sm:$0xf]
    %v65 = vld [vmem:[#allocation2 + $0x3c] sm:$0xf]
    %v66 = vld [vmem:[#allocation5] sm:$0xf]
    %v67 = vld [vmem:[#allocation5 + $0x4] sm:$0xf]
    %v68 = vld [vmem:[#allocation5 + $0x8] sm:$0xf]
    %v69 = vld [vmem:[#allocation5 + $0xc] sm:$0xf]
    %v70 = vld [vmem:[#allocation5 + $0x10] sm:$0xf]
    %v71 = vld [vmem:[#allocation5 + $0x14] sm:$0xf]
    %v72 = vld [vmem:[#allocation5 + $0x18] sm:$0xf]
    %v73 = vld [vmem:[#allocation5 + $0x1c] sm:$0xf]
    %v74 = vld [vmem:[#allocation5 + $0x20] sm:$0xf]
    %v75 = vld [vmem:[#allocation5 + $0x24] sm:$0xf]
    %v76 = vld [vmem:[#allocation5 + $0x28] sm:$0xf]
    %v77 = vld [vmem:[#allocation5 + $0x2c] sm:$0xf]
    %v78 = vld [vmem:[#allocation5 + $0x30] sm:$0xf]
    %v79 = vld [vmem:[#allocation5 + $0x34] sm:$0xf]
    %v80 = vld [vmem:[#allocation5 + $0x38] sm:$0xf]
    %v81 = vld [vmem:[#allocation5 + $0x3c] sm:$0xf]
    %v98 = vunpack.c.l.b16 %v50
    %v99 = vunpack.c.l.b16 %v51
    %v100 = vunpack.c.l.b16 %v52
    %v101 = vunpack.c.l.b16 %v53
    %v102 = vunpack.c.l.b16 %v54
    %v103 = vunpack.c.l.b16 %v55
    %v104 = vunpack.c.l.b16 %v56
    %v105 = vunpack.c.l.b16 %v57
    %v106 = vunpack.c.l.b16 %v58
    %v107 = vunpack.c.l.b16 %v59
    %v108 = vunpack.c.l.b16 %v60
    %v109 = vunpack.c.l.b16 %v61
    %v110 = vunpack.c.l.b16 %v62
    %v111 = vunpack.c.l.b16 %v63
    %v112 = vunpack.c.l.b16 %v64
    %v113 = vunpack.c.l.b16 %v65
    %v114 = vpack.c.b16 %v99, %v98
    %v115 = vpack.c.b16 %v101, %v100
    %v116 = vpack.c.b16 %v103, %v102
    %v117 = vpack.c.b16 %v105, %v104
    %v118 = vpack.c.b16 %v107, %v106
    %v119 = vpack.c.b16 %v109, %v108
    %v120 = vpack.c.b16 %v111, %v110
    %v121 = vpack.c.b16 %v113, %v112
    %v146 = vunpack.c.l.b16 %v66
    %v147 = vunpack.c.l.b16 %v67
    %v148 = vunpack.c.l.b16 %v68
    %v149 = vunpack.c.l.b16 %v69
    %v150 = vunpack.c.l.b16 %v70
    %v151 = vunpack.c.l.b16 %v71
    %v152 = vunpack.c.l.b16 %v72
    %v153 = vunpack.c.l.b16 %v73
    %v154 = vunpack.c.l.b16 %v74
    %v155 = vunpack.c.l.b16 %v75
    %v156 = vunpack.c.l.b16 %v76
    %v157 = vunpack.c.l.b16 %v77
    %v158 = vunpack.c.l.b16 %v78
    %v159 = vunpack.c.l.b16 %v79
    %v160 = vunpack.c.l.b16 %v80
    %v161 = vunpack.c.l.b16 %v81
    %v162 = vpack.c.b16 %v147, %v146
    %v163 = vpack.c.b16 %v149, %v148
    %v164 = vpack.c.b16 %v151, %v150
    %v165 = vpack.c.b16 %v153, %v152
    %v166 = vpack.c.b16 %v155, %v154
    %v167 = vpack.c.b16 %v157, %v156
    %v168 = vpack.c.b16 %v159, %v158
    %v169 = vpack.c.b16 %v161, %v160
    %178 = vmatprep.subr.bf16.mxu0 0
    %179 = vmatpush1.bf16.msra.mxu0 %v169
    %180 = vmatprep.subr.bf16.mxu0 0
    %181 = vmatpush1.bf16.msra.mxu0 %v168
    %182 = vmatprep.subr.bf16.mxu0 0
    %183 = vmatpush1.bf16.msra.mxu0 %v167
    %184 = vmatprep.subr.bf16.mxu0 0
    %185 = vmatpush1.bf16.msra.mxu0 %v166
    %186 = vmatprep.subr.bf16.mxu0 0
    %187 = vmatpush1.bf16.msra.mxu0 %v165
    %188 = vmatprep.subr.bf16.mxu0 0
    %189 = vmatpush1.bf16.msra.mxu0 %v164
    %190 = vmatprep.subr.bf16.mxu0 0
    %191 = vmatpush1.bf16.msra.mxu0 %v163
    %192 = vmatprep.subr.bf16.mxu0 0
    %193 = vmatpush1.bf16.msra.mxu0 %v162
    %194 = vmatprep.subr.bf16.mxu0 0
    %195 = vmatpush2.bf16.msra.mxu0 0
    %196 = vmatprep.subr.bf16.mxu0 0
    %197 = vmatpush2.bf16.msra.mxu0 0
    %198 = vmatprep.subr.bf16.mxu0 0
    %199 = vmatpush2.bf16.msra.mxu0 0
    %200 = vmatprep.subr.bf16.mxu0 0
    %201 = vmatpush2.bf16.msra.mxu0 0
    %202 = vmatprep.subr.bf16.mxu0 0
    %203 = vmatpush2.bf16.msra.mxu0 0
    %204 = vmatprep.subr.bf16.mxu0 0
    %205 = vmatpush2.bf16.msra.mxu0 0
    %206 = vmatprep.subr.bf16.mxu0 0
    %207 = vmatpush2.bf16.msra.mxu0 0
    %208 = vmatprep.subr.bf16.mxu0 0
    %209 = vmatpush2.bf16.msra.mxu0 0
    %210 = vmatprep.mubr.bf16.mxu0 0
    %211 = vmatmul.mubr.bf16.gmra.mxu0 %v114
    %v212 = vpop.f32.mrf.mxu0
    %v213 = vadd.f32 0.0, %v212
    %v214 = vpop.f32.mrf.mxu0
    %v215 = vpop.f32.mrf.mxu0
    %v216 = vadd.f32 0.0, %v215
    %v217 = vpop.f32.mrf.mxu0
    %218 = vmatprep.mubr.bf16.mxu0 0
    %219 = vmatmul.mubr.bf16.gmra.mxu0 %v115
    %v220 = vpop.f32.mrf.mxu0
    %v221 = vadd.f32 0.0, %v220
    %v222 = vpop.f32.mrf.mxu0
    %v223 = vpop.f32.mrf.mxu0
    %v224 = vadd.f32 0.0, %v223
    %v225 = vpop.f32.mrf.mxu0
    %226 = vmatprep.mubr.bf16.mxu0 0
    %227 = vmatmul.mubr.bf16.gmra.mxu0 %v116
    %v228 = vpop.f32.mrf.mxu0
    %v229 = vadd.f32 0.0, %v228
    %v230 = vpop.f32.mrf.mxu0
    %v231 = vpop.f32.mrf.mxu0
    %v232 = vadd.f32 0.0, %v231
    %v233 = vpop.f32.mrf.mxu0
    %234 = vmatprep.mubr.bf16.mxu0 0
    %235 = vmatmul.mubr.bf16.gmra.mxu0 %v117
    %v236 = vpop.f32.mrf.mxu0
    %v237 = vadd.f32 0.0, %v236
    %v238 = vpop.f32.mrf.mxu0
    %v239 = vpop.f32.mrf.mxu0
    %v240 = vadd.f32 0.0, %v239
    %v241 = vpop.f32.mrf.mxu0
    %242 = vmatprep.mubr.bf16.mxu0 0
    %243 = vmatmul.mubr.bf16.gmra.mxu0 %v118
    %v244 = vpop.f32.mrf.mxu0
    %v245 = vadd.f32 0.0, %v244
    %v246 = vpop.f32.mrf.mxu0
    %v247 = vpop.f32.mrf.mxu0
    %v248 = vadd.f32 0.0, %v247
    %v249 = vpop.f32.mrf.mxu0
    %250 = vmatprep.mubr.bf16.mxu0 0
    %251 = vmatmul.mubr.bf16.gmra.mxu0 %v119
    %v252 = vpop.f32.mrf.mxu0
    %v253 = vadd.f32 0.0, %v252
    %v254 = vpop.f32.mrf.mxu0
    %v255 = vpop.f32.mrf.mxu0
    %v256 = vadd.f32 0.0, %v255
    %v257 = vpop.f32.mrf.mxu0
    %258 = vmatprep.mubr.bf16.mxu0 0
    %259 = vmatmul.mubr.bf16.gmra.mxu0 %v120
    %v260 = vpop.f32.mrf.mxu0
    %v261 = vadd.f32 0.0, %v260
    %v262 = vpop.f32.mrf.mxu0
    %v263 = vpop.f32.mrf.mxu0
    %v264 = vadd.f32 0.0, %v263
    %v265 = vpop.f32.mrf.mxu0
    %266 = vmatprep.mubr.bf16.mxu0 0
    %267 = vmatmul.mubr.bf16.gmra.mxu0 %v121
    %v268 = vpop.f32.mrf.mxu0
    %v269 = vadd.f32 0.0, %v268
    %v270 = vpop.f32.mrf.mxu0
    %v271 = vpop.f32.mrf.mxu0
    %v272 = vadd.f32 0.0, %v271
    %v273 = vpop.f32.mrf.mxu0
    %274 = vdwg.mxu0
    %v275 = vld [vmem:[%s2] sm:$0x1]
    %v277 = vlaneseq
    %v278 = vshrl.u32 %v277, 7
    %v279 = vsub.s32 0, %v278
    %v280 = vrot.slane %v275, %v279
    %v282 = vmul.f32 %v213, %v280
    %v283 = vmul.f32 %v216, %v280
    %v284 = vmul.f32 %v221, %v280
    %v285 = vmul.f32 %v224, %v280
    %v286 = vmul.f32 %v229, %v280
    %v287 = vmul.f32 %v232, %v280
    %v288 = vmul.f32 %v237, %v280
    %v289 = vmul.f32 %v240, %v280
    %v290 = vmul.f32 %v245, %v280
    %v291 = vmul.f32 %v248, %v280
    %v292 = vmul.f32 %v253, %v280
    %v293 = vmul.f32 %v256, %v280
    %v294 = vmul.f32 %v261, %v280
    %v295 = vmul.f32 %v264, %v280
    %v296 = vmul.f32 %v269, %v280
    %v297 = vmul.f32 %v272, %v280
    %298 = vadd.xlane.f32.xlu0 %v282
    %v299 = vpop.xlane.xlu0 %298
    %300 = vadd.xlane.f32.xlu0 %v283
    %v301 = vpop.xlane.xlu0 %300
    %302 = vadd.xlane.f32.xlu0 %v284
    %v303 = vpop.xlane.xlu0 %302
    %304 = vadd.xlane.f32.xlu0 %v285
    %v305 = vpop.xlane.xlu0 %304
    %306 = vadd.xlane.f32.xlu0 %v286
    %v307 = vpop.xlane.xlu0 %306
    %308 = vadd.xlane.f32.xlu0 %v287
    %v309 = vpop.xlane.xlu0 %308
    %310 = vadd.xlane.f32.xlu0 %v288
    %v311 = vpop.xlane.xlu0 %310
    %312 = vadd.xlane.f32.xlu0 %v289
    %v313 = vpop.xlane.xlu0 %312
    %314 = vadd.xlane.f32.xlu0 %v290
    %v315 = vpop.xlane.xlu0 %314
    %316 = vadd.xlane.f32.xlu0 %v291
    %v317 = vpop.xlane.xlu0 %316
    %318 = vadd.xlane.f32.xlu0 %v292
    %v319 = vpop.xlane.xlu0 %318
    %320 = vadd.xlane.f32.xlu0 %v293
    %v321 = vpop.xlane.xlu0 %320
    %322 = vadd.xlane.f32.xlu0 %v294
    %v323 = vpop.xlane.xlu0 %322
    %324 = vadd.xlane.f32.xlu0 %v295
    %v325 = vpop.xlane.xlu0 %324
    %326 = vadd.xlane.f32.xlu0 %v296
    %v327 = vpop.xlane.xlu0 %326
    %328 = vadd.xlane.f32.xlu0 %v297
    %v329 = vpop.xlane.xlu0 %328
    %vm330 = vcmask 7168
    %331 = vst.msk [vmem:[%s5] sm:$0xff] %vm330, %v299
    %332 = vst.msk [vmem:[%s5 + $0x8] sm:$0xff] %vm330, %v301
    %333 = vst.msk [vmem:[%s5 + $0x10] sm:$0xff] %vm330, %v303
    %334 = vst.msk [vmem:[%s5 + $0x18] sm:$0xff] %vm330, %v305
    %335 = vst.msk [vmem:[%s5 + $0x20] sm:$0xff] %vm330, %v307
    %336 = vst.msk [vmem:[%s5 + $0x28] sm:$0xff] %vm330, %v309
    %337 = vst.msk [vmem:[%s5 + $0x30] sm:$0xff] %vm330, %v311
    %338 = vst.msk [vmem:[%s5 + $0x38] sm:$0xff] %vm330, %v313
    %339 = vst.msk [vmem:[%s5 + $0x40] sm:$0xff] %vm330, %v315
    %340 = vst.msk [vmem:[%s5 + $0x48] sm:$0xff] %vm330, %v317
    %341 = vst.msk [vmem:[%s5 + $0x50] sm:$0xff] %vm330, %v319
    %342 = vst.msk [vmem:[%s5 + $0x58] sm:$0xff] %vm330, %v321
    %343 = vst.msk [vmem:[%s5 + $0x60] sm:$0xff] %vm330, %v323
    %344 = vst.msk [vmem:[%s5 + $0x68] sm:$0xff] %vm330, %v325
    %345 = vst.msk [vmem:[%s5 + $0x70] sm:$0xff] %vm330, %v327
    %346 = vst.msk [vmem:[%s5 + $0x78] sm:$0xff] %vm330, %v329
    %v347 = vld [vmem:[%s3] sm:$0x1]
    %v349 = vlaneseq
    %v350 = vshrl.u32 %v349, 7
    %v351 = vsub.s32 0, %v350
    %v352 = vrot.slane %v347, %v351
    %v354 = vmul.f32 %v213, %v352
    %v355 = vmul.f32 %v216, %v352
    %v356 = vmul.f32 %v221, %v352
    %v357 = vmul.f32 %v224, %v352
    %v358 = vmul.f32 %v229, %v352
    %v359 = vmul.f32 %v232, %v352
    %v360 = vmul.f32 %v237, %v352
    %v361 = vmul.f32 %v240, %v352
    %v362 = vmul.f32 %v245, %v352
    %v363 = vmul.f32 %v248, %v352
    %v364 = vmul.f32 %v253, %v352
    %v365 = vmul.f32 %v256, %v352
    %v366 = vmul.f32 %v261, %v352
    %v367 = vmul.f32 %v264, %v352
    %v368 = vmul.f32 %v269, %v352
    %v369 = vmul.f32 %v272, %v352
    %370 = vadd.xlane.f32.xlu0 %v354
    %v371 = vpop.xlane.xlu0 %370
    %372 = vadd.xlane.f32.xlu0 %v355
    %v373 = vpop.xlane.xlu0 %372
    %374 = vadd.xlane.f32.xlu0 %v356
    %v375 = vpop.xlane.xlu0 %374
    %376 = vadd.xlane.f32.xlu0 %v357
    %v377 = vpop.xlane.xlu0 %376
    %378 = vadd.xlane.f32.xlu0 %v358
    %v379 = vpop.xlane.xlu0 %378
    %380 = vadd.xlane.f32.xlu0 %v359
    %v381 = vpop.xlane.xlu0 %380
    %382 = vadd.xlane.f32.xlu0 %v360
    %v383 = vpop.xlane.xlu0 %382
    %384 = vadd.xlane.f32.xlu0 %v361
    %v385 = vpop.xlane.xlu0 %384
    %386 = vadd.xlane.f32.xlu0 %v362
    %v387 = vpop.xlane.xlu0 %386
    %388 = vadd.xlane.f32.xlu0 %v363
    %v389 = vpop.xlane.xlu0 %388
    %390 = vadd.xlane.f32.xlu0 %v364
    %v391 = vpop.xlane.xlu0 %390
    %392 = vadd.xlane.f32.xlu0 %v365
    %v393 = vpop.xlane.xlu0 %392
    %394 = vadd.xlane.f32.xlu0 %v366
    %v395 = vpop.xlane.xlu0 %394
    %396 = vadd.xlane.f32.xlu0 %v367
    %v397 = vpop.xlane.xlu0 %396
    %398 = vadd.xlane.f32.xlu0 %v368
    %v399 = vpop.xlane.xlu0 %398
    %400 = vadd.xlane.f32.xlu0 %v369
    %v401 = vpop.xlane.xlu0 %400
    %402 = vst.msk [vmem:[%s6] sm:$0xff] %vm330, %v371
    %403 = vst.msk [vmem:[%s6 + $0x8] sm:$0xff] %vm330, %v373
    %404 = vst.msk [vmem:[%s6 + $0x10] sm:$0xff] %vm330, %v375
    %405 = vst.msk [vmem:[%s6 + $0x18] sm:$0xff] %vm330, %v377
    %406 = vst.msk [vmem:[%s6 + $0x20] sm:$0xff] %vm330, %v379
    %407 = vst.msk [vmem:[%s6 + $0x28] sm:$0xff] %vm330, %v381
    %408 = vst.msk [vmem:[%s6 + $0x30] sm:$0xff] %vm330, %v383
    %409 = vst.msk [vmem:[%s6 + $0x38] sm:$0xff] %vm330, %v385
    %410 = vst.msk [vmem:[%s6 + $0x40] sm:$0xff] %vm330, %v387
    %411 = vst.msk [vmem:[%s6 + $0x48] sm:$0xff] %vm330, %v389
    %412 = vst.msk [vmem:[%s6 + $0x50] sm:$0xff] %vm330, %v391
    %413 = vst.msk [vmem:[%s6 + $0x58] sm:$0xff] %vm330, %v393
    %414 = vst.msk [vmem:[%s6 + $0x60] sm:$0xff] %vm330, %v395
    %415 = vst.msk [vmem:[%s6 + $0x68] sm:$0xff] %vm330, %v397
    %416 = vst.msk [vmem:[%s6 + $0x70] sm:$0xff] %vm330, %v399
    %417 = vst.msk [vmem:[%s6 + $0x78] sm:$0xff] %vm330, %v401
    %v418 = vpack.c.bf16 %v216, %v213
    %v419 = vpack.c.bf16 %v224, %v221
    %v420 = vpack.c.bf16 %v232, %v229
    %v421 = vpack.c.bf16 %v240, %v237
    %v422 = vpack.c.bf16 %v248, %v245
    %v423 = vpack.c.bf16 %v256, %v253
    %v424 = vpack.c.bf16 %v264, %v261
    %v425 = vpack.c.bf16 %v272, %v269
    %v434 = vunpack.c.l.b16 %v418
    %v435 = vunpack.c.h.b16 %v418
    %v436 = vunpack.c.l.b16 %v419
    %v437 = vunpack.c.h.b16 %v419
    %v438 = vunpack.c.l.b16 %v420
    %v439 = vunpack.c.h.b16 %v420
    %v440 = vunpack.c.l.b16 %v421
    %v441 = vunpack.c.h.b16 %v421
    %v442 = vunpack.c.l.b16 %v422
    %v443 = vunpack.c.h.b16 %v422
    %v444 = vunpack.c.l.b16 %v423
    %v445 = vunpack.c.h.b16 %v423
    %v446 = vunpack.c.l.b16 %v424
    %v447 = vunpack.c.h.b16 %v424
    %v448 = vunpack.c.l.b16 %v425
    %v449 = vunpack.c.h.b16 %v425
    %v450 = vpack.c.b16 %v434, %v434
    %v451 = vpack.c.b16 %v435, %v435
    %v452 = vpack.c.b16 %v436, %v436
    %v453 = vpack.c.b16 %v437, %v437
    %v454 = vpack.c.b16 %v438, %v438
    %v455 = vpack.c.b16 %v439, %v439
    %v456 = vpack.c.b16 %v440, %v440
    %v457 = vpack.c.b16 %v441, %v441
    %v458 = vpack.c.b16 %v442, %v442
    %v459 = vpack.c.b16 %v443, %v443
    %v460 = vpack.c.b16 %v444, %v444
    %v461 = vpack.c.b16 %v445, %v445
    %v462 = vpack.c.b16 %v446, %v446
    %v463 = vpack.c.b16 %v447, %v447
    %v464 = vpack.c.b16 %v448, %v448
    %v465 = vpack.c.b16 %v449, %v449
    %482 = vst [vmem:[#allocation7] sm:$0xf] %v450
    %483 = vst [vmem:[#allocation7 + $0x4] sm:$0xf] %v451
    %484 = vst [vmem:[#allocation7 + $0x8] sm:$0xf] %v452
    %485 = vst [vmem:[#allocation7 + $0xc] sm:$0xf] %v453
    %486 = vst [vmem:[#allocation7 + $0x10] sm:$0xf] %v454
    %487 = vst [vmem:[#allocation7 + $0x14] sm:$0xf] %v455
    %488 = vst [vmem:[#allocation7 + $0x18] sm:$0xf] %v456
    %489 = vst [vmem:[#allocation7 + $0x1c] sm:$0xf] %v457
    %490 = vst [vmem:[#allocation7 + $0x20] sm:$0xf] %v458
    %491 = vst [vmem:[#allocation7 + $0x24] sm:$0xf] %v459
    %492 = vst [vmem:[#allocation7 + $0x28] sm:$0xf] %v460
    %493 = vst [vmem:[#allocation7 + $0x2c] sm:$0xf] %v461
    %494 = vst [vmem:[#allocation7 + $0x30] sm:$0xf] %v462
    %495 = vst [vmem:[#allocation7 + $0x34] sm:$0xf] %v463
    %496 = vst [vmem:[#allocation7 + $0x38] sm:$0xf] %v464
    %497 = vst [vmem:[#allocation7 + $0x3c] sm:$0xf] %v465
    // Predicated region
    $region26: #{tpu_custom_call.1} parent=1 // pred_check
      _
    $region27: #{tpu_custom_call.1} parent=1 // pred_check_branch
      %499 = sbr.rel (0) target = $region29
    $region28: #{tpu_custom_call.1} parent=1 // pred_region
      %s501 = ssub.s32 1024, 1024
      %502 = vsyncadd [#allocation4], %s501
      %s503 = sshll.u32 [#allocation7], 4
      %s504 = int_to_ptr.vmem [resolvable:$true] %s503
      %509 = dma.vmem_to_hbm [thread:$0]  %s504, 1024, %s4, [#allocation4], 64, 64, 4
    $region29: #{tpu_custom_call.1} parent=1 // pred_fallthru
      _
    // Predicated region
    $region30: #{tpu_custom_call.1} parent=1 // pred_check
      _
    $region31: #{tpu_custom_call.1} parent=1 // pred_check_branch
      %511 = sbr.rel (0) target = $region33
    $region32: #{tpu_custom_call.1} parent=1 // pred_region
      _
    $region33: #{tpu_custom_call.1} parent=1 // pred_fallthru
      _
    // Predicated region
    $region34: #{tpu_custom_call.1} parent=1 // pred_check
      _
    $region35: #{tpu_custom_call.1} parent=1 // pred_check_branch
      %513 = sbr.rel (0) target = $region37
    $region36: #{tpu_custom_call.1} parent=1 // pred_region
      _
    $region37: #{tpu_custom_call.1} parent=1 // pred_fallthru
      _
    // Predicated region
    $region38: #{tpu_custom_call.1} parent=1 // pred_check
      _
    $region39: #{tpu_custom_call.1} parent=1 // pred_check_branch
      %515 = sbr.rel (0) target = $region41
    $region40: #{tpu_custom_call.1} parent=1 // pred_region
      %516 = dma.done [#allocation4], 1024
    $region41: #{tpu_custom_call.1} parent=1 // pred_fallthru
      _
    // Predicated region
    $region42: #{tpu_custom_call.1} parent=1 // pred_check
      _
    $region43: #{tpu_custom_call.1} parent=1 // pred_check_branch
      %518 = sbr.rel (0) target = $region45
    $region44: #{tpu_custom_call.1} parent=1 // pred_region
      _
    $region45: #{tpu_custom_call.1} parent=1 // pred_fallthru
      _
    // Predicated region
    $region46: #{tpu_custom_call.1} parent=1 // pred_check
      _
    $region47: #{tpu_custom_call.1} parent=1 // pred_check_branch
      %520 = sbr.rel (0) target = $region49
    $region48: #{tpu_custom_call.1} parent=1 // pred_region
      _
    $region49: #{tpu_custom_call.1} parent=1 // pred_fallthru
      _
    %521 = vsyncpa [#allocation3], 1
    %522 = vsyncpa [#allocation6], 1
    %523 = vsyncpa [#allocation4], 1

</llo_original>
